<compile_context>
chip_gen: v6e
topology: v6e:2x2x1
jax: 0.10.0
libtpu: 0.0.40
codegen_flags: <defaults>
</compile_context>

<pallas_src>
import functools
import math

import jax
import jax.numpy as jnp
from jax.experimental import pallas as pl
from jax.experimental.pallas import tpu as pltpu


# Activation / weight dtype between kernels. f32 here to match the PyTorch
# reference numerics at test scale; use jnp.bfloat16 on v6e/v7x in production
# (matmuls already accumulate in f32, element-wise math stays f32).
ACT_DTYPE = jnp.float32


def _default_vmem_limit():
    """Generation-specific scoped-VMEM limit (leave headroom below physical)."""
    try:
        cap = pltpu.get_tpu_info().vmem_capacity_bytes
    except Exception:
        cap = 128 * 1024 * 1024
    return max(32 * 1024 * 1024, min(int(cap) * 3 // 4, 100 * 1024 * 1024))


_VMEM_LIMIT = _default_vmem_limit()


def _tile(dim, target, align=8):
    """Largest aligned divisor of `dim` that is <= target (full dim if small).

    Never silently returns the full dimension for large `dim`: that was a
    VMEM-blowup hazard when dim % target != 0.
    """
    if dim <= target:
        return dim
    hi = min(target, dim)
    for t in range(hi, align - 1, -1):
        if dim % t == 0 and t % align == 0:
            return t
    for t in range(hi, 0, -1):
        if dim % t == 0:
            return t
    return dim


def _resident_spec(shape, index_map):
    """BlockSpec for grid-constant blocks; single-buffered when supported."""
    try:
        return pl.BlockSpec(shape, index_map, pipeline_mode=pl.Buffered(1))
    except Exception:  # older jax without pipeline_mode / Buffered
        return pl.BlockSpec(shape, index_map)


# ----------------------------- kernel helpers -------------------------------

def _layer_norm_f32(y, g, b, eps=1e-12):
    """LayerNorm over the last axis; y, g, b already f32."""
    mu = jnp.mean(y, axis=-1, keepdims=True)
    d = y - mu
    var = jnp.mean(d * d, axis=-1, keepdims=True)
    inv = jax.lax.rsqrt(var + eps)
    return d * inv * g + b


def _gelu_f32(h):
    """Exact erf-GELU (matches HF BERT 'gelu')."""
    return 0.5 * h * (1.0 + jax.lax.erf(h * 0.7071067811865476))


# ----------------------------- Pallas kernels ------------------------------

def _dense_bias_kernel(x_ref, w_ref, b_ref, o_ref):
    """y = x @ W + b, full-K block (no reduction grid axis)."""
    y = jnp.dot(x_ref[...], w_ref[...], preferred_element_type=jnp.float32)
    o_ref[...] = (y + b_ref[...].astype(jnp.float32)).astype(o_ref.dtype)


def _matmul_bias_kernel(x_ref, w_ref, b_ref, o_ref, acc_ref):
    """Tiled y = x @ W + b with f32 VMEM accumulator over the K grid axis."""
    @pl.when(pl.program_id(2) == 0)
    def _():
        acc_ref[...] = jnp.zeros_like(acc_ref)

    acc_ref[...] += jnp.dot(x_ref[...], w_ref[...],
                            preferred_element_type=jnp.float32)

    @pl.when(pl.program_id(2) == pl.num_programs(2) - 1)
    def _():
        o_ref[...] = (acc_ref[...] + b_ref[...].astype(jnp.float32)
                      ).astype(o_ref.dtype)


def _ln_kernel(x_ref, g_ref, b_ref, o_ref):
    """LayerNorm(x) — no residual input (embedding LN)."""
    y = x_ref[...].astype(jnp.float32)
    o_ref[...] = _layer_norm_f32(y, g_ref[...].astype(jnp.float32),
                                 b_ref[...].astype(jnp.float32)
                                 ).astype(o_ref.dtype)


def _attn_proj_ln_kernel(qkv_ref, m_ref, res_ref, w_ref, b_ref, g_ref, be_ref,
                         o_ref, *, n_heads, dh, scale):
    """Per-batch: LayerNorm(attention(qkv) @ ao_w + ao_b + residual).

    qkv_ref: [1, S, 3H] packed (Q | K | V) along lanes.  Per head the context
    is projected through its ao_w row-slab and accumulated into an f32 value,
    so no concat and only one [S, S] score matrix is live at a time.
    """
    qkv = qkv_ref[0]                                    # (S, 3H)
    m = m_ref[0].astype(jnp.float32)                    # (1, S) additive mask
    H = n_heads * dh
    # start accumulator with residual + output-projection bias
    acc = res_ref[0].astype(jnp.float32) + b_ref[...].astype(jnp.float32)
    # TODO(synk): flash-style streaming softmax + (batch, head) grid for long S.
    for h in range(n_heads):                            # static unroll
        q = qkv[:, h * dh:(h + 1) * dh].astype(jnp.float32) * scale
        k = qkv[:, H + h * dh:H + (h + 1) * dh]
        v = qkv[:, 2 * H + h * dh:2 * H + (h + 1) * dh]
        s = jax.lax.dot_general(q, k.astype(jnp.float32),
                                (((1,), (1,)), ((), ())),
                                preferred_element_type=jnp.float32)   # (S, S)
        s = s + m
        s = s - jnp.max(s, axis=-1, keepdims=True)
        p = jnp.exp(s)
        p = p * pl.reciprocal(jnp.sum(p, axis=-1, keepdims=True), approx=True)
        ctx = jnp.dot(p.astype(v.dtype), v,
                      preferred_element_type=jnp.float32)             # (S, dh)
        acc = acc + jnp.dot(ctx.astype(w_ref.dtype),
                            w_ref[h * dh:(h + 1) * dh, :],
                            preferred_element_type=jnp.float32)
    o_ref[0] = _layer_norm_f32(acc, g_ref[...].astype(jnp.float32),
                               be_ref[...].astype(jnp.float32)
                               ).astype(o_ref.dtype)


def _ffn_res_ln_kernel(x_ref, w1_ref, b1_ref, w2_ref, b2_ref, g_ref, be_ref,
                       o_ref, acc_ref):
    """LayerNorm(gelu(x@W1+b1)@W2 + b2 + x), tiled over the intermediate dim.

    Grid = (M tiles, I tiles).  The [tm, ti] GELU tile never leaves VMEM and
    the FFN weights are streamed in [H, ti] / [ti, H] slabs (no full-resident
    f32 FFN weights -> fits v7x's 64 MiB VMEM).
    """
    j = pl.program_id(1)

    @pl.when(j == 0)
    def _():
        acc_ref[...] = jnp.zeros_like(acc_ref)

    x = x_ref[...]
    h = jnp.dot(x, w1_ref[...], preferred_element_type=jnp.float32)
    h = _gelu_f32(h + b1_ref[...].astype(jnp.float32))
    acc_ref[...] += jnp.dot(h.astype(w2_ref.dtype), w2_ref[...],
                            preferred_element_type=jnp.float32)

    @pl.when(j == pl.num_programs(1) - 1)
    def _():
        y = acc_ref[...] + b2_ref[...].astype(jnp.float32) + x.astype(jnp.float32)
        o_ref[...] = _layer_norm_f32(y, g_ref[...].astype(jnp.float32),
                                     be_ref[...].astype(jnp.float32)
                                     ).astype(o_ref.dtype)


def _pooler_kernel(cls_ref, w_ref, b_ref, o_ref):
    """pooler_output = tanh(cls @ W + b)."""
    y = jnp.dot(cls_ref[...], w_ref[...], preferred_element_type=jnp.float32)
    y = y + b_ref[...].astype(jnp.float32)
    o_ref[...] = jnp.tanh(y).astype(o_ref.dtype)


# ----------------------------- Pallas wrappers ------------------------------

def dense_bias(x, w, b, *, tm=256, tn=256, tk=512):
    """Tiled y = x @ W + b  (used for the fused QKV projection)."""
    M, K = x.shape
    N = w.shape[1]
    tm = _tile(M, tm, align=8)
    tn = _tile(N, tn, align=128)

    if K <= 1024:
        # Full-K block: no reduction axis, no accumulator, no revisit writes.
        return pl.pallas_call(
            _dense_bias_kernel,
            grid=(M // tm, N // tn),
            in_specs=[pl.BlockSpec((tm, K), lambda i, j: (i, 0)),
                      pl.BlockSpec((K, tn), lambda i, j: (0, j)),
                      pl.BlockSpec((1, tn), lambda i, j: (0, j))],
            out_specs=pl.BlockSpec((tm, tn), lambda i, j: (i, j)),
            out_shape=jax.ShapeDtypeStruct((M, N), ACT_DTYPE),
            compiler_params=pltpu.CompilerParams(
                dimension_semantics=("parallel", "parallel"),
                vmem_limit_bytes=_VMEM_LIMIT),
        )(x, w, b)

    tk = _tile(K, tk, align=128)
    return pl.pallas_call(
        _matmul_bias_kernel,
        grid=(M // tm, N // tn, K // tk),
        in_specs=[pl.BlockSpec((tm, tk), lambda i, j, k: (i, k)),
                  pl.BlockSpec((tk, tn), lambda i, j, k: (k, j)),
                  pl.BlockSpec((1, tn), lambda i, j, k: (0, j))],
        out_specs=pl.BlockSpec((tm, tn), lambda i, j, k: (i, j)),
        out_shape=jax.ShapeDtypeStruct((M, N), ACT_DTYPE),
        scratch_shapes=[pltpu.VMEM((tm, tn), jnp.float32)],
        compiler_params=pltpu.CompilerParams(
            dimension_semantics=("parallel", "parallel", "arbitrary"),
            vmem_limit_bytes=_VMEM_LIMIT),
    )(x, w, b)


def layer_norm(x, g, b, *, tm=512):
    M, H = x.shape
    tm = _tile(M, tm, align=8)
    return pl.pallas_call(
        _ln_kernel,
        grid=(M // tm,),
        in_specs=[pl.BlockSpec((tm, H), lambda i: (i, 0)),
                  _resident_spec((1, H), lambda i: (0, 0)),
                  _resident_spec((1, H), lambda i: (0, 0))],
        out_specs=pl.BlockSpec((tm, H), lambda i: (i, 0)),
        out_shape=jax.ShapeDtypeStruct((M, H), ACT_DTYPE),
        compiler_params=pltpu.CompilerParams(
            dimension_semantics=("parallel",),
            vmem_limit_bytes=_VMEM_LIMIT),
    )(x, g, b)


def attention_out_ln(qkv3, amask, res3, ao_w, ao_b, g, beta, *, n_heads):
    """Fused attention + output projection + residual + LayerNorm.

    qkv3: [B, S, 3H] packed; amask: [B, 1, S] additive; res3: [B, S, H].
    Returns [B, S, H].
    """
    B, S, threeH = qkv3.shape
    H = threeH // 3
    dh = H // n_heads
    kernel = functools.partial(_attn_proj_ln_kernel, n_heads=n_heads, dh=dh,
                               scale=1.0 / math.sqrt(dh))
    return pl.pallas_call(
        kernel,
        grid=(B,),
        in_specs=[pl.BlockSpec((1, S, threeH), lambda b: (b, 0, 0)),
                  pl.BlockSpec((1, 1, S), lambda b: (b, 0, 0)),
                  pl.BlockSpec((1, S, H), lambda b: (b, 0, 0)),
                  _resident_spec((H, H), lambda b: (0, 0)),
                  _resident_spec((1, H), lambda b: (0, 0)),
                  _resident_spec((1, H), lambda b: (0, 0)),
                  _resident_spec((1, H), lambda b: (0, 0))],
        out_specs=pl.BlockSpec((1, S, H), lambda b: (b, 0, 0)),
        out_shape=jax.ShapeDtypeStruct((B, S, H), ACT_DTYPE),
        compiler_params=pltpu.CompilerParams(
            dimension_semantics=("parallel",),
            vmem_limit_bytes=_VMEM_LIMIT),
    )(qkv3, amask, res3, ao_w, ao_b, g, beta)


def ffn_residual_ln(x, w1, b1, w2, b2, g, beta, *, tm=256, ti=512):
    """Fused FFN sublayer, tiled over the intermediate dimension I."""
    M, H = x.shape
    I = w1.shape[1]
    tm = _tile(M, tm, align=8)
    ti = _tile(I, ti, align=128)
    return pl.pallas_call(
        _ffn_res_ln_kernel,
        grid=(M // tm, I // ti),
        in_specs=[pl.BlockSpec((tm, H), lambda i, j: (i, 0)),
                  pl.BlockSpec((H, ti), lambda i, j: (0, j)),
                  pl.BlockSpec((1, ti), lambda i, j: (0, j)),
                  pl.BlockSpec((ti, H), lambda i, j: (j, 0)),
                  _resident_spec((1, H), lambda i, j: (0, 0)),
                  _resident_spec((1, H), lambda i, j: (0, 0)),
                  _resident_spec((1, H), lambda i, j: (0, 0))],
        out_specs=pl.BlockSpec((tm, H), lambda i, j: (i, 0)),
        out_shape=jax.ShapeDtypeStruct((M, H), ACT_DTYPE),
        scratch_shapes=[pltpu.VMEM((tm, H), jnp.float32)],
        compiler_params=pltpu.CompilerParams(
            dimension_semantics=("parallel", "arbitrary"),
            vmem_limit_bytes=_VMEM_LIMIT),
    )(x, w1, b1, w2, b2, g, beta)


def pooler(cls, w, b):
    B, H = cls.shape
    return pl.pallas_call(
        _pooler_kernel,
        out_shape=jax.ShapeDtypeStruct((B, H), jnp.float32),
    )(cls, w, b)


# ----------------------------- Model definition -----------------------------

class Config:
    vocab_size = 100
    hidden = 32
    n_heads = 4
    n_layers = 2
    intermediate = 64
    max_pos = 16
    type_vocab = 2


def init_params(cfg, key):
    std = 0.02
    keys = iter(jax.random.split(key, 64))

    def nrm(shape):
        return (std * jax.random.normal(next(keys), shape, dtype=jnp.float32)
                ).astype(ACT_DTYPE)

    def zeros(shape):
        return jnp.zeros(shape, ACT_DTYPE)

    def ones(shape):
        return jnp.ones(shape, ACT_DTYPE)

    H, I = cfg.hidden, cfg.intermediate
    params = {
        "word_emb": nrm((cfg.vocab_size, H)),
        "pos_emb": nrm((cfg.max_pos, H)),
        "type_emb": nrm((cfg.type_vocab, H)),
        "emb_ln_g": ones((1, H)),
        "emb_ln_b": zeros((1, H)),
        "pooler_w": nrm((H, H)),
        "pooler_b": zeros((1, H)),
        "layers": [],
    }
    for _ in range(cfg.n_layers):
        params["layers"].append({
            # fused QKV projection weight/bias (columns ordered [Q | K | V])
            "qkv_w": nrm((H, 3 * H)), "qkv_b": zeros((1, 3 * H)),
            "ao_w": nrm((H, H)), "ao_b": zeros((1, H)),
            "attn_ln_g": ones((1, H)), "attn_ln_b": zeros((1, H)),
            "ff1_w": nrm((H, I)), "ff1_b": zeros((1, I)),
            "ff2_w": nrm((I, H)), "ff2_b": zeros((1, H)),
            "ffn_ln_g": ones((1, H)), "ffn_ln_b": zeros((1, H)),
        })
    return params


def text_encoder_forward(params, cfg, input_ids, attention_mask):
    """Returns pooler_output [B, hidden] = tanh(W * h_CLS + b)."""
    B, S = input_ids.shape
    H, nH = cfg.hidden, cfg.n_heads
    assert S <= cfg.max_pos, "sequence length exceeds max_position_embeddings"

    # --- embeddings (gather is glue; LayerNorm is a Pallas kernel) ---
    # token_type_ids default to all-zero, matching BertModel when not passed.
    emb = (jnp.take(params["word_emb"], input_ids, axis=0)
           + params["pos_emb"][:S][None, :, :]
           + params["type_emb"][0][None, None, :])            # [B, S, H]
    x = emb.reshape(B * S, H).astype(ACT_DTYPE)
    x = layer_norm(x, params["emb_ln_g"], params["emb_ln_b"])  # no-residual LN

    # additive attention mask: 0 where attended, -1e4 where padded
    amask = ((1.0 - attention_mask.astype(jnp.float32)) * -10000.0
             ).reshape(B, 1, S)

    for lp in params["layers"]:
        # fused QKV dense: [B*S, H] @ [H, 3H]
        qkv = dense_bias(x, lp["qkv_w"], lp["qkv_b"])          # [B*S, 3H]
        # fused: attention + out-proj + residual + LayerNorm
        x = attention_out_ln(qkv.reshape(B, S, 3 * H), amask,
                             x.reshape(B, S, H),
                             lp["ao_w"], lp["ao_b"],
                             lp["attn_ln_g"], lp["attn_ln_b"],
                             n_heads=nH).reshape(B * S, H)
        # fused: FF1 + GELU + FF2 + residual + LayerNorm (I-tiled)
        x = ffn_residual_ln(x, lp["ff1_w"], lp["ff1_b"],
                            lp["ff2_w"], lp["ff2_b"],
                            lp["ffn_ln_g"], lp["ffn_ln_b"])

    # --- pooler: dense + tanh on the [CLS] token ---
    cls = x.reshape(B, S, H)[:, 0, :]                          # [B, H]
    return pooler(cls, params["pooler_w"], params["pooler_b"])


# ----------------------- pure-JAX reference (for checking) ------------------

def reference_forward(params, cfg, input_ids, attention_mask):
    B, S = input_ids.shape
    H, nH = cfg.hidden, cfg.n_heads
    dh = H // nH

    def ln(y, g, b):
        mu = jnp.mean(y, -1, keepdims=True)
        var = jnp.mean((y - mu) ** 2, -1, keepdims=True)
        return (y - mu) / jnp.sqrt(var + 1e-12) * g + b

    emb = (jnp.take(params["word_emb"], input_ids, axis=0)
           + params["pos_emb"][:S][None, :, :]
           + params["type_emb"][0][None, None, :]).astype(jnp.float32)
    x = ln(emb, params["emb_ln_g"], params["emb_ln_b"])       # [B, S, H]
    mask = ((1.0 - attention_mask.astype(jnp.float32))
            * -10000.0)[:, None, None, :]                      # [B,1,1,S]

    for lp in params["layers"]:
        qkv = x @ lp["qkv_w"] + lp["qkv_b"]
        q, k, v = jnp.split(qkv, 3, axis=-1)

        def heads(t):
            return t.reshape(B, S, nH, dh).transpose(0, 2, 1, 3)

        q, k, v = heads(q), heads(k), heads(v)
        s = (q @ k.transpose(0, 1, 3, 2)) / math.sqrt(dh) + mask
        p = jax.nn.softmax(s, axis=-1)
        ctx = (p @ v).transpose(0, 2, 1, 3).reshape(B, S, H)
        x = ln(ctx @ lp["ao_w"] + lp["ao_b"] + x,
               lp["attn_ln_g"], lp["attn_ln_b"])
        h = x @ lp["ff1_w"] + lp["ff1_b"]
        h = 0.5 * h * (1.0 + jax.lax.erf(h * 0.7071067811865476))
        x = ln(h @ lp["ff2_w"] + lp["ff2_b"] + x,
               lp["ffn_ln_g"], lp["ffn_ln_b"])

    cls = x[:, 0, :]
    return jnp.tanh(cls @ params["pooler_w"] + params["pooler_b"])


# ---------------------------------- main ------------------------------------

if __name__ == "__main__":
    cfg = Config()
    B, S = 2, 8

    key = jax.random.PRNGKey(0)
    k_param, k_ids = jax.random.split(key)

    params = init_params(cfg, k_param)
    input_ids = jax.random.randint(k_ids, (B, S), 0, cfg.vocab_size,
                                   dtype=jnp.int32)
    # second sequence has two padding positions
    attention_mask = jnp.array([[1, 1, 1, 1, 1, 1, 1, 1],
                                [1, 1, 1, 1, 1, 1, 0, 0]], dtype=jnp.int32)

    pooled = text_encoder_forward(params, cfg, input_ids, attention_mask)
    pooled = jax.block_until_ready(pooled)

    assert pooled.shape == (B, cfg.hidden)
    assert pooled.dtype == jnp.float32
    assert bool(jnp.all(jnp.isfinite(pooled)))

    ref = reference_forward(params, cfg, input_ids, attention_mask)
    err = float(jnp.max(jnp.abs(pooled - ref)))
    assert err < 5e-2, f"mismatch vs pure-JAX reference: {err}"

    print("KERNEL_OK")
</pallas_src>

<mosaic_0001>
module attributes {stable_mosaic.version = 11 : i64} {
  func.func @_ln_kernel(%arg0: i32, %arg1: memref<16x32xf32, #tpu.memory_space<vmem>>, %arg2: memref<1x32xf32, #tpu.memory_space<vmem>>, %arg3: memref<1x32xf32, #tpu.memory_space<vmem>>, %arg4: memref<16x32xf32, #tpu.memory_space<vmem>>) attributes {dimension_semantics = [#tpu.dimension_semantics<parallel>], iteration_bounds = array<i64: 1>, scalar_prefetch = 0 : i64, scratch_operands = 0 : i64, tpu.core_type = #tpu.core_type<tc>, window_params = [{transform_indices = @transform_0, window_bounds = array<i64: 16, 32>}, {pipeline_mode = #tpu.pipeline_mode<synchronous>, transform_indices = @transform_1, window_bounds = array<i64: 1, 32>}, {pipeline_mode = #tpu.pipeline_mode<synchronous>, transform_indices = @transform_2, window_bounds = array<i64: 1, 32>}, {transform_indices = @transform_3, window_bounds = array<i64: 16, 32>}]} {
    %c0 = arith.constant 0 : index
    %c0_0 = arith.constant 0 : index
    %0 = vector.load %arg1[%c0, %c0_0] : memref<16x32xf32, #tpu.memory_space<vmem>>, vector<16x32xf32>
    %c0_1 = arith.constant 0 : index
    %c0_2 = arith.constant 0 : index
    %1 = vector.load %arg2[%c0_1, %c0_2] : memref<1x32xf32, #tpu.memory_space<vmem>>, vector<1x32xf32>
    %c0_3 = arith.constant 0 : index
    %c0_4 = arith.constant 0 : index
    %2 = vector.load %arg3[%c0_3, %c0_4] : memref<1x32xf32, #tpu.memory_space<vmem>>, vector<1x32xf32>
    %cst = arith.constant dense<0.000000e+00> : vector<16xf32>
    %3 = vector.multi_reduction <add>, %0, %cst [1] : vector<16x32xf32> to vector<16xf32>
    %4 = vector.shape_cast %3 : vector<16xf32> to vector<16x1xf32>
    %cst_5 = arith.constant 3.200000e+01 : f32
    %5 = vector.broadcast %cst_5 : f32 to vector<16x1xf32>
    %6 = arith.divf %4, %5 : vector<16x1xf32>
    %7 = vector.broadcast %6 : vector<16x1xf32> to vector<16x32xf32>
    %8 = arith.subf %0, %7 : vector<16x32xf32>
    %9 = arith.mulf %8, %8 : vector<16x32xf32>
    %cst_6 = arith.constant dense<0.000000e+00> : vector<16xf32>
    %10 = vector.multi_reduction <add>, %9, %cst_6 [1] : vector<16x32xf32> to vector<16xf32>
    %11 = vector.shape_cast %10 : vector<16xf32> to vector<16x1xf32>
    %cst_7 = arith.constant 3.200000e+01 : f32
    %12 = vector.broadcast %cst_7 : f32 to vector<16x1xf32>
    %13 = arith.divf %11, %12 : vector<16x1xf32>
    %cst_8 = arith.constant 9.99999996E-13 : f32
    %14 = vector.broadcast %cst_8 : f32 to vector<16x1xf32>
    %15 = arith.addf %13, %14 : vector<16x1xf32>
    %16 = math.rsqrt %15 : vector<16x1xf32>
    %17 = vector.broadcast %16 : vector<16x1xf32> to vector<16x32xf32>
    %18 = arith.mulf %8, %17 : vector<16x32xf32>
    %19 = vector.broadcast %1 : vector<1x32xf32> to vector<16x32xf32>
    %20 = arith.mulf %18, %19 : vector<16x32xf32>
    %21 = vector.broadcast %2 : vector<1x32xf32> to vector<16x32xf32>
    %22 = arith.addf %20, %21 : vector<16x32xf32>
    %c0_9 = arith.constant 0 : index
    %c0_10 = arith.constant 0 : index
    %23 = vector.load %arg4[%c0_9, %c0_10] : memref<16x32xf32, #tpu.memory_space<vmem>>, vector<16x32xf32>
    tpu.vector_store %arg4[%c0_9, %c0_10], %22 {strides = array<i32>} : memref<16x32xf32, #tpu.memory_space<vmem>>, vector<16x32xf32>,
    return
  }
  func.func @transform_0(%arg0: i32) -> (i32, i32) {
    %c0_i32 = arith.constant 0 : i32
    %c0_i32_0 = arith.constant 0 : i32
    return %arg0, %c0_i32 : i32, i32
  }
  func.func @transform_1(%arg0: i32) -> (i32, i32) {
    %c0_i32 = arith.constant 0 : i32
    %c0_i32_0 = arith.constant 0 : i32
    %c0_i32_1 = arith.constant 0 : i32
    return %c0_i32, %c0_i32_0 : i32, i32
  }
  func.func @transform_2(%arg0: i32) -> (i32, i32) {
    %c0_i32 = arith.constant 0 : i32
    %c0_i32_0 = arith.constant 0 : i32
    %c0_i32_1 = arith.constant 0 : i32
    return %c0_i32, %c0_i32_0 : i32, i32
  }
  func.func @transform_3(%arg0: i32) -> (i32, i32) {
    %c0_i32 = arith.constant 0 : i32
    %c0_i32_0 = arith.constant 0 : i32
    return %arg0, %c0_i32 : i32, i32
  }
}

</mosaic_0001>

<llo_original>
// kernel: tpu_custom_call.1
$region0: #{tpu_custom_call.1}
  #allocation0 [shape = 'u32[]', space=smem, size = 0x4, offset = 0x4, fixed_abs, tag = 'smem constant byte address 0x4 - core index']
  #allocation1 [shape = 'u32[144,128]{1,0:T(1,128)}', space=vmem, size = 0x12000, scoped, tag = 'internal scratch']
  %s0 = inlined_call_operand.hbm [shape: f32[16,32], index: 0, kind: input, shape index: {}]
  %s1 = inlined_call_operand.vmem [shape: f32[1,32], index: 1, kind: input, shape index: {}]
  %s2 = inlined_call_operand.vmem [shape: f32[1,32], index: 2, kind: input, shape index: {}]
  %s3 = inlined_call_operand.hbm [shape: f32[16,32], index: 3, kind: output, shape index: {}]
  %s4 = sld [smem:[#allocation0]]
  $region26: #{tpu_custom_call.1} parent=0
    _
  %s6 = ssub.s32 1, %s4
  %s7 = scalar_select 0, %s6, %s4
  $region1: #{tpu_custom_call.1} parent=0
    #allocation2 [shape = 'u8[8192]{0}', space=vmem, size = 0x2000, scoped, tag = 'input window, operand 0, single buffered']
    #allocation3 [shape = 's32[1]{0}', space=sflag, size = 0x4, scoped, tag = 'scoped memory for tpu_custom_call.1']
    #allocation4 [shape = 's32[1]{0}', space=sflag, size = 0x4, scoped, tag = 'scoped memory for tpu_custom_call.1']
    #allocation5 [shape = 'u8[8192]{0}', space=vmem, size = 0x2000, scoped, tag = 'output window, operand 0, single buffered']
    %8 = vsyncpa [#allocation3], 0
    %9 = vsyncpa [#allocation4], 0
    // Predicated region
    $region2: #{tpu_custom_call.1} parent=1 // pred_check
      _
    $region3: #{tpu_custom_call.1} parent=1 // pred_check_branch
      %11 = sbr.rel (0) target = $region5
    $region4: #{tpu_custom_call.1} parent=1 // pred_region
      %s13 = ssub.s32 256, 256
      %14 = vsyncadd [#allocation3], %s13
      %s15 = sshll.u32 [#allocation2], 4
      %s16 = int_to_ptr.vmem [resolvable:$true] %s15
      %21 = dma.hbm_to_vmem [thread:$0]  %s0, 256, %s16, [#allocation3], 128, 128, 8
    $region5: #{tpu_custom_call.1} parent=1 // pred_fallthru
      _
    // Predicated region
    $region6: #{tpu_custom_call.1} parent=1 // pred_check
      _
    $region7: #{tpu_custom_call.1} parent=1 // pred_check_branch
      %23 = sbr.rel (0) target = $region9
    $region8: #{tpu_custom_call.1} parent=1 // pred_region
      _
    $region9: #{tpu_custom_call.1} parent=1 // pred_fallthru
      _
    // Predicated region
    $region10: #{tpu_custom_call.1} parent=1 // pred_check
      _
    $region11: #{tpu_custom_call.1} parent=1 // pred_check_branch
      %25 = sbr.rel (0) target = $region13
    $region12: #{tpu_custom_call.1} parent=1 // pred_region
      _
    $region13: #{tpu_custom_call.1} parent=1 // pred_fallthru
      _
    // Predicated region
    $region14: #{tpu_custom_call.1} parent=1 // pred_check
      _
    $region15: #{tpu_custom_call.1} parent=1 // pred_check_branch
      %27 = sbr.rel (0) target = $region17
    $region16: #{tpu_custom_call.1} parent=1 // pred_region
      %28 = dma.done [#allocation3], 256
    $region17: #{tpu_custom_call.1} parent=1 // pred_fallthru
      _
    %v29 = vld [vmem:[#allocation2] sm:$0xff]
    %v30 = vld [vmem:[#allocation2 + $0x8] sm:$0xff]
    %v31 = vld [vmem:[%s1] sm:$0x1]
    %v32 = vld [vmem:[%s2] sm:$0x1]
    %vm33 = vcmask 261120
    %v34 = vsel %vm33, %v29, 0.0
    %35 = vadd.xlane.f32.xlu0 %v34
    %v36 = vpop.xlane.xlu0 %35
    %v37 = vsel %vm33, %v30, 0.0
    %38 = vadd.xlane.f32.xlu0 %v37
    %v39 = vpop.xlane.xlu0 %38
    %v40 = vrcp.pop 32.0
    %v41 = vmul.f32 %v36, %v40
    %v42 = vmul.f32 %v39, %v40
    %v43 = vsub.f32 %v29, %v41
    %v44 = vsub.f32 %v30, %v42
    %v45 = vmul.f32 %v43, %v43
    %v46 = vmul.f32 %v44, %v44
    %v47 = vsel %vm33, %v45, 0.0
    %48 = vadd.xlane.f32.xlu0 %v47
    %v49 = vpop.xlane.xlu0 %48
    %v50 = vsel %vm33, %v46, 0.0
    %51 = vadd.xlane.f32.xlu0 %v50
    %v52 = vpop.xlane.xlu0 %51
    %v53 = vmul.f32 %v49, %v40
    %v54 = vmul.f32 %v52, %v40
    %v55 = vadd.f32 %v53, 1e-12
    %v56 = vadd.f32 %v54, 1e-12
    %v57 = vrsqrt.pop %v55
    %v58 = vrsqrt.pop %v56
    %v59 = vmul.f32 %v43, %v57
    %v60 = vmul.f32 %v44, %v58
    %v62 = vlaneseq
    %v63 = vshrl.u32 %v62, 7
    %v64 = vsub.s32 0, %v63
    %v65 = vrot.slane %v31, %v64
    %v67 = vmul.f32 %v59, %v65
    %v68 = vmul.f32 %v60, %v65
    %v70 = vlaneseq
    %v71 = vshrl.u32 %v70, 7
    %v72 = vsub.s32 0, %v71
    %v73 = vrot.slane %v32, %v72
    %v75 = vadd.f32 %v67, %v73
    %v76 = vadd.f32 %v68, %v73
    %77 = vst.msk [vmem:[#allocation5] sm:$0xff] %vm33, %v75
    %78 = vst.msk [vmem:[#allocation5 + $0x8] sm:$0xff] %vm33, %v76
    // Predicated region
    $region18: #{tpu_custom_call.1} parent=1 // pred_check
      _
    $region19: #{tpu_custom_call.1} parent=1 // pred_check_branch
      %80 = sbr.rel (0) target = $region21
    $region20: #{tpu_custom_call.1} parent=1 // pred_region
      %s82 = ssub.s32 256, 256
      %83 = vsyncadd [#allocation4], %s82
      %s84 = sshll.u32 [#allocation5], 4
      %s85 = int_to_ptr.vmem [resolvable:$true] %s84
      %90 = dma.vmem_to_hbm [thread:$0]  %s85, 256, %s3, [#allocation4], 128, 128, 8
    $region21: #{tpu_custom_call.1} parent=1 // pred_fallthru
      _
    // Predicated region
    $region22: #{tpu_custom_call.1} parent=1 // pred_check
      _
    $region23: #{tpu_custom_call.1} parent=1 // pred_check_branch
      %92 = sbr.rel (0) target = $region25
    $region24: #{tpu_custom_call.1} parent=1 // pred_region
      %93 = dma.done [#allocation4], 256
    $region25: #{tpu_custom_call.1} parent=1 // pred_fallthru
      _
    %94 = vsyncpa [#allocation3], 1
    %95 = vsyncpa [#allocation4], 1

</llo_original>
